<compile_context>
chip_gen: v7x
topology: tpu7x:2x2x1
jax: 0.10.0
libtpu: 0.0.40
codegen_flags: <defaults>
</compile_context>

<pallas_src>
import functools
import math

import jax
import jax.numpy as jnp
import numpy as np
from jax.experimental import pallas as pl
from jax.experimental.pallas import tpu as pltpu


def _round_up(x, m):
    return ((x + m - 1) // m) * m


# ----------------------------------------------------------------------------
# Kernel: one grid step processes Bt batch elements, flattened to rows = Bt*N.
#   qkv   = x @ W_qkv + b_qkv            (fused q/k/v emb + MHA in_proj)
#   s     = (q k^T) / sqrt(E), masked by block-diagonal adjacency
#   attn  = softmax(s)
#   out   = (attn v) @ Wo + bo           (MHA out_proj, 128-lane padded)
# ----------------------------------------------------------------------------
def gat_kernel(x_ref, mask_ref, wqkv_ref, bqkv_ref, wo_ref, bo_ref, out_ref,
               *, e, p):
    # Fused projection: one (rows, Cin) @ (Cin, 3P) MXU pass, f32 accumulation.
    qkv = jnp.dot(x_ref[...], wqkv_ref[...],
                  preferred_element_type=jnp.float32) + bqkv_ref[...]

    # 128-lane-aligned slices of the 3P-wide slab: no relayout copies.
    q = qkv[:, 0 * p:1 * p].astype(jnp.bfloat16)
    k = qkv[:, 1 * p:2 * p].astype(jnp.bfloat16)
    v = qkv[:, 2 * p:3 * p].astype(jnp.bfloat16)

    # Flattened scores: one (rows, P) x (rows, P) contraction over the last
    # dims (q k^T).  Zero-padded columns contribute nothing; scale uses true E.
    scale = jnp.float32(1.0 / math.sqrt(e))
    scores = jax.lax.dot_general(
        q, k, dimension_numbers=(((1,), (1,)), ((), ())),
        preferred_element_type=jnp.float32) * scale

    # Block-diagonal adjacency mask, tested directly on int8.  Disallowed
    # (non-edge or cross-batch) entries get a large finite negative so a
    # fully-masked row stays finite (PyTorch's -inf fill would yield NaN).
    allowed = mask_ref[...] != 0
    scores = jnp.where(allowed, scores, jnp.float32(-1e30))

    # Softmax over keys, all f32 elementwise math; reciprocal on the EUP.
    m = jnp.max(scores, axis=-1, keepdims=True)
    pexp = jnp.exp(scores - m)
    denom = jnp.sum(pexp, axis=-1, keepdims=True)
    attn = pexp * pl.reciprocal(denom, approx=True)

    ctx = jnp.dot(attn.astype(jnp.bfloat16), v,
                  preferred_element_type=jnp.float32)

    # Out-projection straight into the lane-dense (rows, Pout) slab.
    out_ref[...] = jnp.dot(ctx.astype(jnp.bfloat16), wo_ref[...],
                           preferred_element_type=jnp.float32) + bo_ref[...]


# ----------------------------------------------------------------------------
# Parameter fusion / padding (f32 math, bf16 matmul weights).
# ----------------------------------------------------------------------------
def _fuse_params(params, e, p, p_out):
    """Fold q/k/v Linears into the MHA in_proj, zero-pad every segment to a
    128-lane boundary, and cast matmul weights to bf16 (biases stay f32)."""
    def seg(w_emb, b_emb, w_in, b_in):
        w = w_emb @ w_in                    # (Cin, E)
        b = b_emb @ w_in + b_in             # (1, E)
        return (jnp.pad(w, ((0, 0), (0, p - e))),
                jnp.pad(b, ((0, 0), (0, p - e))))

    wq, bq = seg(params["wq"], params["bq"], params["wiq"], params["biq"])
    wk, bk = seg(params["wk"], params["bk"], params["wik"], params["bik"])
    wv, bv = seg(params["wv"], params["bv"], params["wiv"], params["biv"])
    wqkv = jnp.concatenate([wq, wk, wv], axis=1).astype(jnp.bfloat16)
    bqkv = jnp.concatenate([bq, bk, bv], axis=1).astype(jnp.float32)
    wo = jnp.pad(params["wo"], ((0, p - e), (0, p_out - e))).astype(jnp.bfloat16)
    bo = jnp.pad(params["bo"], ((0, 0), (0, p_out - e))).astype(jnp.float32)
    return wqkv, bqkv, wo, bo


# ----------------------------------------------------------------------------
# Generation-aware tiling helpers.
# ----------------------------------------------------------------------------
def _tpu_info():
    """Best-effort (num_tensorcores, physical VMEM bytes, MXU rows)."""
    try:
        kind = jax.devices()[0].device_kind.lower()
    except Exception:
        kind = ""
    if "v7" in kind:
        return 2, 64 * 2**20, 256          # 2 TCs, 64 MiB VMEM, 256x256 MXU
    if "v5 lite" in kind or "v5e" in kind:
        return 1, 128 * 2**20, 128         # 1 TC, 128 MiB VMEM, 128x128 MXU
    return 1, 128 * 2**20, 256             # v6e & other single-TC chips


def _step_vmem_bytes(rows, cin, p, p_out):
    """Per-grid-step VMEM estimate: double-buffered blocks + live temporaries."""
    x_blk = rows * cin * 2                       # bf16
    mask_blk = rows * rows                       # int8
    out_blk = rows * p_out * 4                   # f32
    weights = cin * 3 * p * 2 + 3 * p * 4 + p * p_out * 2 + p_out * 4
    pipelined = 2 * (x_blk + mask_blk + weights + out_blk)
    temps = (rows * 3 * p * 6                    # qkv f32 + bf16 q/k/v copies
             + rows * rows * (3 * 4 + 2)         # scores/exp/attn f32 + attn bf16
             + rows * p * 6                      # ctx f32 + bf16
             + rows * p_out * 4)                 # out f32
    return pipelined + temps


def _pick_block_b(B, N, cin, p, p_out, num_tc, vmem_bytes, mxu_rows):
    """Batch elements per grid step.

    * (Bt*N) must be a multiple of 8 (sublane constraint) unless the block
      covers the full row extent (Bt == B).
    * Single-TC chips (v5e/v6e): grid of 1 is fine (the grid is a serial
      loop); pick the largest Bt that fills one MXU pass and fits VMEM.
    * v7x (2 TCs): prefer grid_b a multiple of 2 so ("parallel",) shards
      across both cores, then apply the same sizing.
    * Rows are capped near one MXU tile: beyond that the flattened
      block-diagonal scores matmul only adds quadratic wasted work.
    """
    budget = vmem_bytes - (16 << 20)
    divisors = [d for d in range(1, B + 1) if B % d == 0]
    legal = [d for d in divisors if (d * N) % 8 == 0 or d == B]
    fitting = [d for d in legal
               if _step_vmem_bytes(d * N, cin, p, p_out) <= budget]
    feasible = fitting or [min(legal)]
    if num_tc > 1:
        even = [d for d in feasible if (B // d) % num_tc == 0]
        if even:
            feasible = even
    under = [d for d in feasible if d * N <= mxu_rows]
    return max(under) if under else min(feasible)


# ----------------------------------------------------------------------------
# Wrapper.
# ----------------------------------------------------------------------------
@jax.jit
def gat_forward(node_encodings, adj_mat, params):
    """node_encodings: [B, N, Cin] f32, adj_mat: [B, N, N] bool -> [B, N, E]."""
    B, N, Cin = node_encodings.shape
    E = params["wq"].shape[1]
    P = _round_up(E, 128)        # q/k/v segment width (lane-aligned)
    P_out = _round_up(E, 128)    # lane-dense output width

    num_tc, vmem_bytes, mxu_rows = _tpu_info()
    Bt = _pick_block_b(B, N, Cin, P, P_out, num_tc, vmem_bytes, mxu_rows)
    grid_b = B // Bt
    rows = Bt * N

    wqkv, bqkv, wo, bo = _fuse_params(params, E, P, P_out)

    # bf16 node rows (only ever consumed as MXU operands).
    x2 = node_encodings.reshape(B * N, Cin).astype(jnp.bfloat16)

    # Block-diagonal adjacency per grid step, shipped as int8:
    #   mask[g*rows + bi*N + ni, bj*N + nj] = (bi == bj) & adj[g*Bt + bi, ni, nj]
    adj_r = adj_mat.reshape(grid_b, Bt, N, 1, N)
    eye_bt = jnp.eye(Bt, dtype=bool).reshape(1, Bt, 1, Bt, 1)
    mask = jnp.logical_and(adj_r, eye_bt).reshape(grid_b * rows, rows)
    mask = mask.astype(jnp.int8)

    kernel = functools.partial(gat_kernel, e=E, p=P)

    flops = (2 * B * N * Cin * 3 * P           # fused projection
             + 2 * B * N * rows * P * 2        # scores + attn @ v
             + 2 * B * N * P * P_out)          # out projection
    bytes_accessed = (x2.size * 2 + mask.size
                      + wqkv.size * 2 + bqkv.size * 4
                      + wo.size * 2 + bo.size * 4
                      + B * N * P_out * 4)
    cost = pl.CostEstimate(flops=flops,
                           transcendentals=B * N * rows + B * N,
                           bytes_accessed=bytes_accessed)

    vmem_limit = max(32 << 20,
                     int(1.25 * _step_vmem_bytes(rows, Cin, P, P_out)) + (8 << 20))
    vmem_limit = min(vmem_limit, vmem_bytes - (8 << 20))

    # NOTE: the four weight/bias inputs are grid-invariant; for large Cin/E on
    # v7x they could use pipeline_mode=pl.Buffered(1) to skip double-buffering,
    # but at these sizes the VMEM saving is negligible, so defaults are kept.
    out = pl.pallas_call(
        kernel,
        out_shape=jax.ShapeDtypeStruct((B * N, P_out), jnp.float32),
        grid=(grid_b,),
        in_specs=[
            pl.BlockSpec((rows, Cin), lambda b: (b, 0)),      # x rows (bf16)
            pl.BlockSpec((rows, rows), lambda b: (b, 0)),     # blockdiag mask (int8)
            pl.BlockSpec((Cin, 3 * P), lambda b: (0, 0)),     # fused W_qkv
            pl.BlockSpec((1, 3 * P), lambda b: (0, 0)),       # fused b_qkv
            pl.BlockSpec((P, P_out), lambda b: (0, 0)),       # out_proj W (padded)
            pl.BlockSpec((1, P_out), lambda b: (0, 0)),       # out_proj b (padded)
        ],
        out_specs=pl.BlockSpec((rows, P_out), lambda b: (b, 0)),
        compiler_params=pltpu.CompilerParams(
            dimension_semantics=("parallel",),
            vmem_limit_bytes=vmem_limit),
        cost_estimate=cost,
    )(x2, mask, wqkv, bqkv, wo, bo)

    # Drop the lane padding and restore [B, N, E].
    return out[:, :E].reshape(B, N, E)


# ----------------------------------------------------------------------------
# Pure-JAX f32 reference mirroring the PyTorch forward.
# ----------------------------------------------------------------------------
def gat_reference(node_encodings, adj_mat, p):
    x = node_encodings
    q = x @ p["wq"] + p["bq"][0]
    k = x @ p["wk"] + p["bk"][0]
    v = x @ p["wv"] + p["bv"][0]
    q2 = q @ p["wiq"] + p["biq"][0]
    k2 = k @ p["wik"] + p["bik"][0]
    v2 = v @ p["wiv"] + p["biv"][0]
    E = q2.shape[-1]
    scores = jnp.einsum("bne,bme->bnm", q2, k2) / jnp.sqrt(jnp.float32(E))
    scores = jnp.where(adj_mat, scores, -jnp.inf)
    attn = jax.nn.softmax(scores, axis=-1)
    ctx = jnp.einsum("bnm,bme->bne", attn, v2)
    return ctx @ p["wo"] + p["bo"][0]


def init_params(key, in_channels, out_channels):
    """Deterministic synthetic parameters. Weights stored pre-transposed
    ([in, out]) so x @ W applies them directly; biases as [1, out]."""
    keys = jax.random.split(key, 14)
    s = 0.1

    def w(k, i, o):
        return (s * jax.random.normal(k, (i, o))).astype(jnp.float32)

    def b(k, o):
        return (s * jax.random.normal(k, (1, o))).astype(jnp.float32)

    Cin, E = in_channels, out_channels
    return {
        "wq": w(keys[0], Cin, E),  "bq": b(keys[1], E),
        "wk": w(keys[2], Cin, E),  "bk": b(keys[3], E),
        "wv": w(keys[4], Cin, E),  "bv": b(keys[5], E),
        "wiq": w(keys[6], E, E),   "biq": b(keys[7], E),
        "wik": w(keys[8], E, E),   "bik": b(keys[9], E),
        "wiv": w(keys[10], E, E),  "biv": b(keys[11], E),
        "wo": w(keys[12], E, E),   "bo": b(keys[13], E),
    }


if __name__ == "__main__":
    B, N, C_IN, C_OUT = 2, 8, 16, 32

    root = jax.random.PRNGKey(0)
    k_x, k_adj, k_params = jax.random.split(root, 3)

    node_encodings = jax.random.normal(k_x, (B, N, C_IN), dtype=jnp.float32)

    # Random boolean adjacency; force self-edges so every row has >=1 allowed
    # key (matches lane-graph usage; avoids NaN rows in the f32 reference).
    adj = jax.random.bernoulli(k_adj, p=0.5, shape=(B, N, N))
    adj = jnp.logical_or(adj, jnp.eye(N, dtype=bool)[None, :, :])

    params = init_params(k_params, C_IN, C_OUT)

    out = gat_forward(node_encodings, adj, params)
    out = jax.block_until_ready(out)

    ref = gat_reference(node_encodings, adj, params)
    # Tolerance loosened for bf16 matmul operands + approx reciprocal
    # (expected error ~1e-3 absolute at these magnitudes).
    np.testing.assert_allclose(np.asarray(out), np.asarray(ref),
                               rtol=5e-2, atol=5e-3)

    assert out.shape == (B, N, C_OUT)
    print("KERNEL_OK")
</pallas_src>

<mosaic_0001>
module attributes {stable_mosaic.version = 11 : i64} {
  func.func @gat_kernel(%arg0: i32, %arg1: memref<16x16xbf16, #tpu.memory_space<vmem>>, %arg2: memref<16x16xi8, #tpu.memory_space<vmem>>, %arg3: memref<16x384xbf16, #tpu.memory_space<vmem>>, %arg4: memref<1x384xf32, #tpu.memory_space<vmem>>, %arg5: memref<128x128xbf16, #tpu.memory_space<vmem>>, %arg6: memref<1x128xf32, #tpu.memory_space<vmem>>, %arg7: memref<16x128xf32, #tpu.memory_space<vmem>>) attributes {dimension_semantics = [#tpu.dimension_semantics<parallel>], iteration_bounds = array<i64: 1>, scalar_prefetch = 0 : i64, scratch_operands = 0 : i64, tpu.core_type = #tpu.core_type<tc>, window_params = [{transform_indices = @transform_0, window_bounds = array<i64: 16, 16>}, {transform_indices = @transform_1, window_bounds = array<i64: 16, 16>}, {pipeline_mode = #tpu.pipeline_mode<synchronous>, transform_indices = @transform_2, window_bounds = array<i64: 16, 384>}, {pipeline_mode = #tpu.pipeline_mode<synchronous>, transform_indices = @transform_3, window_bounds = array<i64: 1, 384>}, {pipeline_mode = #tpu.pipeline_mode<synchronous>, transform_indices = @transform_4, window_bounds = array<i64: 128, 128>}, {pipeline_mode = #tpu.pipeline_mode<synchronous>, transform_indices = @transform_5, window_bounds = array<i64: 1, 128>}, {transform_indices = @transform_6, window_bounds = array<i64: 16, 128>}]} {
    %c0 = arith.constant 0 : index
    %c0_0 = arith.constant 0 : index
    %0 = vector.load %arg1[%c0, %c0_0] : memref<16x16xbf16, #tpu.memory_space<vmem>>, vector<16x16xbf16>
    %c0_1 = arith.constant 0 : index
    %c0_2 = arith.constant 0 : index
    %1 = vector.load %arg3[%c0_1, %c0_2] : memref<16x384xbf16, #tpu.memory_space<vmem>>, vector<16x384xbf16>
    %cst = arith.constant dense<0.000000e+00> : vector<16x384xf32>
    %2 = tpu.matmul %0, %1, %cst {dimension_numbers = #tpu.dot_dimension_numbers<[1], [0], [0], [1], [0, 0, 1, 1], [], []>} : vector<16x16xbf16>, vector<16x384xbf16>, vector<16x384xf32> -> vector<16x384xf32>
    %c0_3 = arith.constant 0 : index
    %c0_4 = arith.constant 0 : index
    %3 = vector.load %arg4[%c0_3, %c0_4] : memref<1x384xf32, #tpu.memory_space<vmem>>, vector<1x384xf32>
    %4 = vector.broadcast %3 : vector<1x384xf32> to vector<16x384xf32>
    %5 = arith.addf %2, %4 : vector<16x384xf32>
    %6 = vector.extract_strided_slice %5 {offsets = [0, 0], sizes = [16, 128], strides = [1, 1]} : vector<16x384xf32> to vector<16x128xf32>
    %7 = arith.truncf %6 : vector<16x128xf32> to vector<16x128xbf16>
    %8 = vector.extract_strided_slice %5 {offsets = [0, 128], sizes = [16, 128], strides = [1, 1]} : vector<16x384xf32> to vector<16x128xf32>
    %9 = arith.truncf %8 : vector<16x128xf32> to vector<16x128xbf16>
    %10 = vector.extract_strided_slice %5 {offsets = [0, 256], sizes = [16, 128], strides = [1, 1]} : vector<16x384xf32> to vector<16x128xf32>
    %11 = arith.truncf %10 : vector<16x128xf32> to vector<16x128xbf16>
    %cst_5 = arith.constant dense<0.000000e+00> : vector<16x16xf32>
    %12 = tpu.matmul %7, %9, %cst_5 {dimension_numbers = #tpu.dot_dimension_numbers<[1], [1], [0], [0], [0, 0, 1, 0], [], []>} : vector<16x128xbf16>, vector<16x128xbf16>, vector<16x16xf32> -> vector<16x16xf32>
    %cst_6 = arith.constant 0.176776692 : f32
    %13 = vector.broadcast %cst_6 : f32 to vector<16x16xf32>
    %14 = arith.mulf %12, %13 : vector<16x16xf32>
    %c0_7 = arith.constant 0 : index
    %c0_8 = arith.constant 0 : index
    %15 = vector.load %arg2[%c0_7, %c0_8] : memref<16x16xi8, #tpu.memory_space<vmem>>, vector<16x16xi8>
    %c0_i8 = arith.constant 0 : i8
    %16 = vector.broadcast %c0_i8 : i8 to vector<16x16xi8>
    %17 = arith.cmpi ne, %15, %16 : vector<16x16xi8>
    %cst_9 = arith.constant -1.000000e+30 : f32
    %18 = vector.broadcast %cst_9 : f32 to vector<16x16xf32>
    %19 = arith.select %17, %14, %18 : vector<16x16xi1>, vector<16x16xf32>
    %cst_10 = arith.constant dense<0xFF800000> : vector<16xf32>
    %20 = vector.multi_reduction <maximumf>, %19, %cst_10 [1] : vector<16x16xf32> to vector<16xf32>
    %21 = vector.shape_cast %20 : vector<16xf32> to vector<16x1xf32>
    %22 = vector.broadcast %21 : vector<16x1xf32> to vector<16x16xf32>
    %23 = arith.subf %19, %22 : vector<16x16xf32>
    %24 = math.exp %23 : vector<16x16xf32>
    %cst_11 = arith.constant dense<0.000000e+00> : vector<16xf32>
    %25 = vector.multi_reduction <add>, %24, %cst_11 [1] : vector<16x16xf32> to vector<16xf32>
    %26 = vector.shape_cast %25 : vector<16xf32> to vector<16x1xf32>
    %27 = tpu.reciprocal %26 {approx = true} : vector<16x1xf32> -> vector<16x1xf32>
    %28 = vector.broadcast %27 : vector<16x1xf32> to vector<16x16xf32>
    %29 = arith.mulf %24, %28 : vector<16x16xf32>
    %30 = arith.truncf %29 : vector<16x16xf32> to vector<16x16xbf16>
    %cst_12 = arith.constant dense<0.000000e+00> : vector<16x128xf32>
    %31 = tpu.matmul %30, %11, %cst_12 {dimension_numbers = #tpu.dot_dimension_numbers<[1], [0], [0], [1], [0, 0, 1, 1], [], []>} : vector<16x16xbf16>, vector<16x128xbf16>, vector<16x128xf32> -> vector<16x128xf32>
    %32 = arith.truncf %31 : vector<16x128xf32> to vector<16x128xbf16>
    %c0_13 = arith.constant 0 : index
    %c0_14 = arith.constant 0 : index
    %33 = vector.load %arg5[%c0_13, %c0_14] : memref<128x128xbf16, #tpu.memory_space<vmem>>, vector<128x128xbf16>
    %cst_15 = arith.constant dense<0.000000e+00> : vector<16x128xf32>
    %34 = tpu.matmul %32, %33, %cst_15 {dimension_numbers = #tpu.dot_dimension_numbers<[1], [0], [0], [1], [0, 0, 1, 1], [], []>} : vector<16x128xbf16>, vector<128x128xbf16>, vector<16x128xf32> -> vector<16x128xf32>
    %c0_16 = arith.constant 0 : index
    %c0_17 = arith.constant 0 : index
    %35 = vector.load %arg6[%c0_16, %c0_17] : memref<1x128xf32, #tpu.memory_space<vmem>>, vector<1x128xf32>
    %36 = vector.broadcast %35 : vector<1x128xf32> to vector<16x128xf32>
    %37 = arith.addf %34, %36 : vector<16x128xf32>
    %c0_18 = arith.constant 0 : index
    %c0_19 = arith.constant 0 : index
    %38 = vector.load %arg7[%c0_18, %c0_19] : memref<16x128xf32, #tpu.memory_space<vmem>>, vector<16x128xf32>
    tpu.vector_store %arg7[%c0_18, %c0_19], %37 {strides = array<i32>} : memref<16x128xf32, #tpu.memory_space<vmem>>, vector<16x128xf32>,
    return
  }
  func.func @transform_0(%arg0: i32) -> (i32, i32) {
    %c0_i32 = arith.constant 0 : i32
    %c0_i32_0 = arith.constant 0 : i32
    return %arg0, %c0_i32 : i32, i32
  }
  func.func @transform_1(%arg0: i32) -> (i32, i32) {
    %c0_i32 = arith.constant 0 : i32
    %c0_i32_0 = arith.constant 0 : i32
    return %arg0, %c0_i32 : i32, i32
  }
  func.func @transform_2(%arg0: i32) -> (i32, i32) {
    %c0_i32 = arith.constant 0 : i32
    %c0_i32_0 = arith.constant 0 : i32
    %c0_i32_1 = arith.constant 0 : i32
    return %c0_i32, %c0_i32_0 : i32, i32
  }
  func.func @transform_3(%arg0: i32) -> (i32, i32) {
    %c0_i32 = arith.constant 0 : i32
    %c0_i32_0 = arith.constant 0 : i32
    %c0_i32_1 = arith.constant 0 : i32
    return %c0_i32, %c0_i32_0 : i32, i32
  }
  func.func @transform_4(%arg0: i32) -> (i32, i32) {
    %c0_i32 = arith.constant 0 : i32
    %c0_i32_0 = arith.constant 0 : i32
    %c0_i32_1 = arith.constant 0 : i32
    return %c0_i32, %c0_i32_0 : i32, i32
  }
  func.func @transform_5(%arg0: i32) -> (i32, i32) {
    %c0_i32 = arith.constant 0 : i32
    %c0_i32_0 = arith.constant 0 : i32
    %c0_i32_1 = arith.constant 0 : i32
    return %c0_i32, %c0_i32_0 : i32, i32
  }
  func.func @transform_6(%arg0: i32) -> (i32, i32) {
    %c0_i32 = arith.constant 0 : i32
    %c0_i32_0 = arith.constant 0 : i32
    return %arg0, %c0_i32 : i32, i32
  }
}

</mosaic_0001>

<llo_original>
// kernel: gat_forward.1
$region0: #{gat_forward.1}
  #allocation0 [shape = 'u32[]', space=smem, size = 0x4, offset = 0x4, fixed_abs, tag = 'smem constant byte address 0x4 - core index']
  #allocation1 [shape = 'u32[144,128]{1,0:T(1,128)}', space=vmem, size = 0x12000, scoped, tag = 'internal scratch']
  %s0 = inlined_call_operand.vmem [shape: bf16[16,16], index: 0, kind: input, shape index: {}]
  %s1 = inlined_call_operand.vmem [shape: s8[16,16], index: 1, kind: input, shape index: {}]
  %s2 = inlined_call_operand.vmem [shape: bf16[16,384], index: 2, kind: input, shape index: {}]
  %s3 = inlined_call_operand.vmem [shape: f32[1,384], index: 3, kind: input, shape index: {}]
  %s4 = inlined_call_operand.vmem [shape: bf16[128,128], index: 4, kind: input, shape index: {}]
  %s5 = inlined_call_operand.vmem [shape: f32[1,128], index: 5, kind: input, shape index: {}]
  %s6 = inlined_call_operand.vmem [shape: f32[16,128], index: 6, kind: output, shape index: {}]
  %s7 = sld [smem:[#allocation0]]
  $region34: #{gat_forward.1} parent=0
    _
  %s9 = ssub.s32 1, %s7
  %s10 = scalar_select 0, %s9, %s7
  // Predicated region
  $region2: #{gat_forward.1} parent=0 // pred_check
    _
  $region3: #{gat_forward.1} parent=0 // pred_check_branch
    %12 = sbr.rel (0) target = $region5
  $region4: #{gat_forward.1} parent=0 // pred_region
    _
  $region5: #{gat_forward.1} parent=0 // pred_fallthru
    _
  // Predicated region
  $region6: #{gat_forward.1} parent=0 // pred_check
    _
  $region7: #{gat_forward.1} parent=0 // pred_check_branch
    %14 = sbr.rel (0) target = $region9
  $region8: #{gat_forward.1} parent=0 // pred_region
    _
  $region9: #{gat_forward.1} parent=0 // pred_fallthru
    _
  // Predicated region
  $region10: #{gat_forward.1} parent=0 // pred_check
    _
  $region11: #{gat_forward.1} parent=0 // pred_check_branch
    %16 = sbr.rel (0) target = $region13
  $region12: #{gat_forward.1} parent=0 // pred_region
    _
  $region13: #{gat_forward.1} parent=0 // pred_fallthru
    _
  // Predicated region
  $region14: #{gat_forward.1} parent=0 // pred_check
    _
  $region15: #{gat_forward.1} parent=0 // pred_check_branch
    %18 = sbr.rel (0) target = $region17
  $region16: #{gat_forward.1} parent=0 // pred_region
    _
  $region17: #{gat_forward.1} parent=0 // pred_fallthru
    _
  // Predicated region
  $region18: #{gat_forward.1} parent=0 // pred_check
    _
  $region19: #{gat_forward.1} parent=0 // pred_check_branch
    %20 = sbr.rel (0) target = $region21
  $region20: #{gat_forward.1} parent=0 // pred_region
    _
  $region21: #{gat_forward.1} parent=0 // pred_fallthru
    _
  // Predicated region
  $region22: #{gat_forward.1} parent=0 // pred_check
    _
  $region23: #{gat_forward.1} parent=0 // pred_check_branch
    %22 = sbr.rel (0) target = $region25
  $region24: #{gat_forward.1} parent=0 // pred_region
    _
  $region25: #{gat_forward.1} parent=0 // pred_fallthru
    _
  %v26 = vld [vmem:[%s0] sm:$0xf]
  %v27 = vld [vmem:[%s0 + $0x4] sm:$0xf]
  %v28 = vld [vmem:[%s2] sm:$0xff]
  %v29 = vld [vmem:[%s2 + $0x8] sm:$0xf]
  %v30 = vld [vmem:[%s2 + $0xc] sm:$0xff]
  %v31 = vld [vmem:[%s2 + $0x14] sm:$0xf]
  %v32 = vld [vmem:[%s3] sm:$0x7]
  %v34 = vlaneseq
  %v35 = vshrl.u32 %v34, 7
  %v36 = vsub.s32 0, %v35
  %v37 = vrot.slane %v32, %v36
  %v38 = vlaneseq
  %v39 = vshrl.u32 %v38, 7
  %v40 = vsub.s32 1, %v39
  %v41 = vrot.slane %v32, %v40
  %v42 = vlaneseq
  %v43 = vshrl.u32 %v42, 7
  %v44 = vsub.s32 2, %v43
  %v45 = vrot.slane %v32, %v44
  %v51 = vunpack.c.l.b16 %v26
  %v52 = vunpack.c.l.b16 %v27
  %v53 = vpack.c.b16 %v52, %v51
  %v58 = vunpack.c.l.b16 %v28
  %v59 = vunpack.c.h.b16 %v28
  %v60 = vunpack.c.l.b16 %v29
  %v61 = vunpack.c.l.b16 %v30
  %v62 = vunpack.c.h.b16 %v30
  %v63 = vunpack.c.l.b16 %v31
  %v64 = vpack.c.b16 %v61, %v58
  %v65 = vpack.c.b16 %v62, %v59
  %v66 = vpack.c.b16 %v63, %v60
  %vm70 = vcmask 130048
  %v72 = vsel %vm70, %v53, 0
  %74 = vmatprep.subr.bf16.mxu0 %v65
  %75 = vmatpush1.bf16.msra.mxu0 %v64
  %76 = vmatprep.subr.bf16.mxu0 0
  %77 = vmatpush1.bf16.msra.mxu0 0
  %78 = vmatprep.subr.bf16.mxu0 0
  %79 = vmatpush1.bf16.msra.mxu0 0
  %80 = vmatprep.subr.bf16.mxu0 0
  %81 = vmatpush1.bf16.msra.mxu0 0
  %82 = vmatprep.subr.bf16.mxu0 0
  %83 = vmatpush1.bf16.msra.mxu0 0
  %84 = vmatprep.subr.bf16.mxu0 0
  %85 = vmatpush1.bf16.msra.mxu0 0
  %86 = vmatprep.subr.bf16.mxu0 0
  %87 = vmatpush1.bf16.msra.mxu0 0
  %88 = vmatprep.subr.bf16.mxu0 0
  %89 = vmatpush1.bf16.msra.mxu0 0
  %90 = vmatprep.subr.bf16.mxu0 0
  %91 = vmatpush1.bf16.msra.mxu0 0
  %92 = vmatprep.subr.bf16.mxu0 0
  %93 = vmatpush1.bf16.msra.mxu0 0
  %94 = vmatprep.subr.bf16.mxu0 0
  %95 = vmatpush1.bf16.msra.mxu0 0
  %96 = vmatprep.subr.bf16.mxu0 0
  %97 = vmatpush1.bf16.msra.mxu0 0
  %98 = vmatprep.subr.bf16.mxu0 0
  %99 = vmatpush1.bf16.msra.mxu0 0
  %100 = vmatprep.subr.bf16.mxu0 0
  %101 = vmatpush1.bf16.msra.mxu0 0
  %102 = vmatprep.subr.bf16.mxu0 0
  %103 = vmatpush1.bf16.msra.mxu0 0
  %104 = vmatprep.subr.bf16.mxu0 0
  %105 = vmatpush1.bf16.msra.mxu0 0
  %106 = vmatprep.mubr.bf16.mxu0 0
  %107 = vmatmul.mubr.bf16.gmra.mrb[0].mxu0 %v72
  %v108 = vpop.f32.mrb[0].mxu0
  %v109 = vadd.f32 %v37, %v108
  %v110 = vpop.f32.mrb[0].mxu0
  %v111 = vadd.f32 %v41, %v110
  %v112 = vpop.f32.mrb[0].mxu0
  %v113 = vadd.f32 %v37, %v112
  %v114 = vpop.f32.mrb[0].mxu0
  %v115 = vadd.f32 %v41, %v114
  %116 = vdwg.mxu0
  %117 = vmatprep.subr.bf16.mxu0 0
  %118 = vmatpush1.bf16.msra.mxu0 %v66
  %119 = vmatprep.subr.bf16.mxu0 0
  %120 = vmatpush1.bf16.msra.mxu0 0
  %121 = vmatprep.subr.bf16.mxu0 0
  %122 = vmatpush1.bf16.msra.mxu0 0
  %123 = vmatprep.subr.bf16.mxu0 0
  %124 = vmatpush1.bf16.msra.mxu0 0
  %125 = vmatprep.subr.bf16.mxu0 0
  %126 = vmatpush1.bf16.msra.mxu0 0
  %127 = vmatprep.subr.bf16.mxu0 0
  %128 = vmatpush1.bf16.msra.mxu0 0
  %129 = vmatprep.subr.bf16.mxu0 0
  %130 = vmatpush1.bf16.msra.mxu0 0
  %131 = vmatprep.subr.bf16.mxu0 0
  %132 = vmatpush1.bf16.msra.mxu0 0
  %133 = vmatprep.subr.bf16.mxu0 0
  %134 = vmatpush1.bf16.msra.mxu0 0
  %135 = vmatprep.subr.bf16.mxu0 0
  %136 = vmatpush1.bf16.msra.mxu0 0
  %137 = vmatprep.subr.bf16.mxu0 0
  %138 = vmatpush1.bf16.msra.mxu0 0
  %139 = vmatprep.subr.bf16.mxu0 0
  %140 = vmatpush1.bf16.msra.mxu0 0
  %141 = vmatprep.subr.bf16.mxu0 0
  %142 = vmatpush1.bf16.msra.mxu0 0
  %143 = vmatprep.subr.bf16.mxu0 0
  %144 = vmatpush1.bf16.msra.mxu0 0
  %145 = vmatprep.subr.bf16.mxu0 0
  %146 = vmatpush1.bf16.msra.mxu0 0
  %147 = vmatprep.subr.bf16.mxu0 0
  %148 = vmatpush1.bf16.msra.mxu0 0
  %149 = vmatprep.mubr.bf16.mxu0 0
  %150 = vmatmul.mubr.bf16.gmra.mrb[0].mxu0 %v72
  %v151 = vpop.f32.mrb[0].mxu0
  %v152 = vadd.f32 %v45, %v151
  %v153 = vpop.f32.mrb[0].mxu0
  %v154 = vpop.f32.mrb[0].mxu0
  %v155 = vadd.f32 %v45, %v154
  %v156 = vpop.f32.mrb[0].mxu0
  %157 = vdwg.mxu0
  %v158 = vpack.c.bf16 %v113, %v109
  %v159 = vpack.c.bf16 %v115, %v111
  %v160 = vpack.c.bf16 %v155, %v152
  %161 = vmatprep.subr.bf16.mxu0 0
  %162 = vmatpush1.bf16.xpose.msra.mxu0 %v159
  %163 = vmatprep.subr.bf16.mxu0 0
  %164 = vmatpush1.bf16.xpose.msra.mxu0 0
  %165 = vmatprep.subr.bf16.mxu0 0
  %166 = vmatpush1.bf16.xpose.msra.mxu0 0
  %167 = vmatprep.subr.bf16.mxu0 0
  %168 = vmatpush1.bf16.xpose.msra.mxu0 0
  %169 = vmatprep.subr.bf16.mxu0 0
  %170 = vmatpush1.bf16.xpose.msra.mxu0 0
  %171 = vmatprep.subr.bf16.mxu0 0
  %172 = vmatpush1.bf16.xpose.msra.mxu0 0
  %173 = vmatprep.subr.bf16.mxu0 0
  %174 = vmatpush1.bf16.xpose.msra.mxu0 0
  %175 = vmatprep.subr.bf16.mxu0 0
  %176 = vmatpush1.bf16.xpose.msra.mxu0 0
  %177 = vmatprep.subr.bf16.mxu0 0
  %178 = vmatpush1.bf16.xpose.msra.mxu0 0
  %179 = vmatprep.subr.bf16.mxu0 0
  %180 = vmatpush1.bf16.xpose.msra.mxu0 0
  %181 = vmatprep.subr.bf16.mxu0 0
  %182 = vmatpush1.bf16.xpose.msra.mxu0 0
  %183 = vmatprep.subr.bf16.mxu0 0
  %184 = vmatpush1.bf16.xpose.msra.mxu0 0
  %185 = vmatprep.subr.bf16.mxu0 0
  %186 = vmatpush1.bf16.xpose.msra.mxu0 0
  %187 = vmatprep.subr.bf16.mxu0 0
  %188 = vmatpush1.bf16.xpose.msra.mxu0 0
  %189 = vmatprep.subr.bf16.mxu0 0
  %190 = vmatpush1.bf16.xpose.msra.mxu0 0
  %191 = vmatprep.subr.bf16.mxu0 0
  %192 = vmatpush1.bf16.xpose.msra.mxu0 0
  %193 = vmatprep.mubr.bf16.mxu0 0
  %194 = vmatmul.mubr.bf16.gmra.mrb[0].mxu0 %v158
  %v195 = vpop.f32.mrb[0].mxu0
  %v196 = vadd.f32 0.0, %v195
  %v197 = vpop.f32.mrb[0].mxu0
  %v198 = vpop.f32.mrb[0].mxu0
  %v199 = vadd.f32 0.0, %v198
  %v200 = vpop.f32.mrb[0].mxu0
  %201 = vdwg.mxu0
  %v202 = vmul.f32 %v196, 0.17677669
  %v203 = vmul.f32 %v199, 0.17677669
  %v204 = vld [vmem:[%s1] sm:$0x3]
  %v205 = vld [vmem:[%s1 + $0x2] sm:$0x3]
  %vm206 = vnez %v204
  %vm207 = vnez %v205
  %v208 = vsel %vm206, 16843009, 0
  %v209 = vsel %vm207, 16843009, 0
  %v210 = vunpack.c.0.s8 %v208
  %v211 = vunpack.c.0.s8 %v209
  %vm212 = vcmp.ne.s32.totalorder %v210, 0
  %vm213 = vcmp.ne.s32.totalorder %v211, 0
  %v214 = vsel %vm212, %v202, -1e+30
  %v215 = vsel %vm213, %v203, -1e+30
  %v216 = vsel %vm70, %v214, -inf
  %217 = vmax.xlane.f32.xlu0 %v216
  %v218 = vpop.xlane.xlu0 %217
  %v219 = vsel %vm70, %v215, -inf
  %220 = vmax.xlane.f32.xlu0 %v219
  %v221 = vpop.xlane.xlu0 %220
  %v222 = vsub.f32 %v214, %v218
  %v223 = vsub.f32 %v215, %v221
  %v224 = vmul.f32 %v222, 1.442695
  %v225 = vpow.pop %v224
  %v226 = vmul.f32 %v223, 1.442695
  %v227 = vpow.pop %v226
  %v228 = vsel %vm70, %v225, 0.0
  %229 = vadd.xlane.f32.xlu0 %v228
  %v230 = vpop.xlane.xlu0 %229
  %v231 = vsel %vm70, %v227, 0.0
  %232 = vadd.xlane.f32.xlu0 %v231
  %v233 = vpop.xlane.xlu0 %232
  %v234 = vrcp.pop %v230
  %v235 = vrcp.pop %v233
  %v236 = vmul.f32 %v225, %v234
  %v237 = vmul.f32 %v227, %v235
  %v238 = vpack.c.bf16 %v237, %v236
  %v240 = vsel %vm70, %v238, 0
  %242 = vmatprep.subr.bf16.mxu0 0
  %243 = vmatpush1.bf16.msra.mxu0 %v160
  %244 = vmatprep.subr.bf16.mxu0 0
  %245 = vmatpush1.bf16.msra.mxu0 0
  %246 = vmatprep.subr.bf16.mxu0 0
  %247 = vmatpush1.bf16.msra.mxu0 0
  %248 = vmatprep.subr.bf16.mxu0 0
  %249 = vmatpush1.bf16.msra.mxu0 0
  %250 = vmatprep.subr.bf16.mxu0 0
  %251 = vmatpush1.bf16.msra.mxu0 0
  %252 = vmatprep.subr.bf16.mxu0 0
  %253 = vmatpush1.bf16.msra.mxu0 0
  %254 = vmatprep.subr.bf16.mxu0 0
  %255 = vmatpush1.bf16.msra.mxu0 0
  %256 = vmatprep.subr.bf16.mxu0 0
  %257 = vmatpush1.bf16.msra.mxu0 0
  %258 = vmatprep.subr.bf16.mxu0 0
  %259 = vmatpush1.bf16.msra.mxu0 0
  %260 = vmatprep.subr.bf16.mxu0 0
  %261 = vmatpush1.bf16.msra.mxu0 0
  %262 = vmatprep.subr.bf16.mxu0 0
  %263 = vmatpush1.bf16.msra.mxu0 0
  %264 = vmatprep.subr.bf16.mxu0 0
  %265 = vmatpush1.bf16.msra.mxu0 0
  %266 = vmatprep.subr.bf16.mxu0 0
  %267 = vmatpush1.bf16.msra.mxu0 0
  %268 = vmatprep.subr.bf16.mxu0 0
  %269 = vmatpush1.bf16.msra.mxu0 0
  %270 = vmatprep.subr.bf16.mxu0 0
  %271 = vmatpush1.bf16.msra.mxu0 0
  %272 = vmatprep.subr.bf16.mxu0 0
  %273 = vmatpush1.bf16.msra.mxu0 0
  %274 = vmatprep.mubr.bf16.mxu0 0
  %275 = vmatmul.mubr.bf16.gmra.mrb[0].mxu0 %v240
  %v276 = vpop.f32.mrb[0].mxu0
  %v277 = vadd.f32 0.0, %v276
  %v278 = vpop.f32.mrb[0].mxu0
  %v279 = vpop.f32.mrb[0].mxu0
  %v280 = vadd.f32 0.0, %v279
  %v281 = vpop.f32.mrb[0].mxu0
  %282 = vdwg.mxu0
  %v283 = vpack.c.bf16 %v280, %v277
  %v284 = vld [vmem:[%s4] sm:$0xf]
  %v285 = vld [vmem:[%s4 + $0x4] sm:$0xf]
  %v286 = vld [vmem:[%s4 + $0x8] sm:$0xf]
  %v287 = vld [vmem:[%s4 + $0xc] sm:$0xf]
  %v288 = vld [vmem:[%s4 + $0x10] sm:$0xf]
  %v289 = vld [vmem:[%s4 + $0x14] sm:$0xf]
  %v290 = vld [vmem:[%s4 + $0x18] sm:$0xf]
  %v291 = vld [vmem:[%s4 + $0x1c] sm:$0xf]
  %v292 = vld [vmem:[%s4 + $0x20] sm:$0xf]
  %v293 = vld [vmem:[%s4 + $0x24] sm:$0xf]
  %v294 = vld [vmem:[%s4 + $0x28] sm:$0xf]
  %v295 = vld [vmem:[%s4 + $0x2c] sm:$0xf]
  %v296 = vld [vmem:[%s4 + $0x30] sm:$0xf]
  %v297 = vld [vmem:[%s4 + $0x34] sm:$0xf]
  %v298 = vld [vmem:[%s4 + $0x38] sm:$0xf]
  %v299 = vld [vmem:[%s4 + $0x3c] sm:$0xf]
  %v300 = vld [vmem:[%s5] sm:$0x1]
  %v302 = vlaneseq
  %v303 = vshrl.u32 %v302, 7
  %v304 = vsub.s32 0, %v303
  %v305 = vrot.slane %v300, %v304
  %v323 = vunpack.c.l.b16 %v284
  %v324 = vunpack.c.l.b16 %v285
  %v325 = vunpack.c.l.b16 %v286
  %v326 = vunpack.c.l.b16 %v287
  %v327 = vunpack.c.l.b16 %v288
  %v328 = vunpack.c.l.b16 %v289
  %v329 = vunpack.c.l.b16 %v290
  %v330 = vunpack.c.l.b16 %v291
  %v331 = vunpack.c.l.b16 %v292
  %v332 = vunpack.c.l.b16 %v293
  %v333 = vunpack.c.l.b16 %v294
  %v334 = vunpack.c.l.b16 %v295
  %v335 = vunpack.c.l.b16 %v296
  %v336 = vunpack.c.l.b16 %v297
  %v337 = vunpack.c.l.b16 %v298
  %v338 = vunpack.c.l.b16 %v299
  %v339 = vpack.c.b16 %v324, %v323
  %v340 = vpack.c.b16 %v326, %v325
  %v341 = vpack.c.b16 %v328, %v327
  %v342 = vpack.c.b16 %v330, %v329
  %v343 = vpack.c.b16 %v332, %v331
  %v344 = vpack.c.b16 %v334, %v333
  %v345 = vpack.c.b16 %v336, %v335
  %v346 = vpack.c.b16 %v338, %v337
  %355 = vmatprep.subr.bf16.mxu0 0
  %356 = vmatpush1.bf16.msra.mxu0 %v339
  %357 = vmatprep.subr.bf16.mxu0 0
  %358 = vmatpush1.bf16.msra.mxu0 %v340
  %359 = vmatprep.subr.bf16.mxu0 0
  %360 = vmatpush1.bf16.msra.mxu0 %v341
  %361 = vmatprep.subr.bf16.mxu0 0
  %362 = vmatpush1.bf16.msra.mxu0 %v342
  %363 = vmatprep.subr.bf16.mxu0 0
  %364 = vmatpush1.bf16.msra.mxu0 %v343
  %365 = vmatprep.subr.bf16.mxu0 0
  %366 = vmatpush1.bf16.msra.mxu0 %v344
  %367 = vmatprep.subr.bf16.mxu0 0
  %368 = vmatpush1.bf16.msra.mxu0 %v345
  %369 = vmatprep.subr.bf16.mxu0 0
  %370 = vmatpush1.bf16.msra.mxu0 %v346
  %371 = vmatprep.subr.bf16.mxu0 0
  %372 = vmatpush1.bf16.msra.mxu0 0
  %373 = vmatprep.subr.bf16.mxu0 0
  %374 = vmatpush1.bf16.msra.mxu0 0
  %375 = vmatprep.subr.bf16.mxu0 0
  %376 = vmatpush1.bf16.msra.mxu0 0
  %377 = vmatprep.subr.bf16.mxu0 0
  %378 = vmatpush1.bf16.msra.mxu0 0
  %379 = vmatprep.subr.bf16.mxu0 0
  %380 = vmatpush1.bf16.msra.mxu0 0
  %381 = vmatprep.subr.bf16.mxu0 0
  %382 = vmatpush1.bf16.msra.mxu0 0
  %383 = vmatprep.subr.bf16.mxu0 0
  %384 = vmatpush1.bf16.msra.mxu0 0
  %385 = vmatprep.subr.bf16.mxu0 0
  %386 = vmatpush1.bf16.msra.mxu0 0
  %387 = vmatprep.mubr.bf16.mxu0 0
  %388 = vmatmul.mubr.bf16.gmra.mrb[0].mxu0 %v283
  %v389 = vpop.f32.mrb[0].mxu0
  %v390 = vadd.f32 %v305, %v389
  %v391 = vpop.f32.mrb[0].mxu0
  %v392 = vpop.f32.mrb[0].mxu0
  %v393 = vadd.f32 %v305, %v392
  %v394 = vpop.f32.mrb[0].mxu0
  %395 = vdwg.mxu0
  %396 = vst [vmem:[%s6] sm:$0xff] %v390
  %397 = vst [vmem:[%s6 + $0x8] sm:$0xff] %v393
  // Predicated region
  $region26: #{gat_forward.1} parent=0 // pred_check
    _
  $region27: #{gat_forward.1} parent=0 // pred_check_branch
    %399 = sbr.rel (0) target = $region29
  $region28: #{gat_forward.1} parent=0 // pred_region
    _
  $region29: #{gat_forward.1} parent=0 // pred_fallthru
    _
  // Predicated region
  $region30: #{gat_forward.1} parent=0 // pred_check
    _
  $region31: #{gat_forward.1} parent=0 // pred_check_branch
    %401 = sbr.rel (0) target = $region33
  $region32: #{gat_forward.1} parent=0 // pred_region
    _
  $region33: #{gat_forward.1} parent=0 // pred_fallthru
    _

</llo_original>
